<compile_context>
chip_gen: v5e
topology: v5e:2x2
jax: 0.10.0
libtpu: 0.0.40
codegen_flags: <defaults>
</compile_context>

<pallas_src>
import functools
import math

import jax
import jax.numpy as jnp
from jax import lax
from jax.experimental import pallas as pl
from jax.experimental.pallas import tpu as pltpu


# ---------------------------------------------------------------------------
# Kernel 1: low-rank linear   y = (x @ u) @ v + b    (row-tiled)
# ---------------------------------------------------------------------------
def _low_rank_linear_kernel(x_ref, u_ref, v_ref, b_ref, o_ref):
    x = x_ref[...]                                                      # (TM, d_in) bf16
    low = jnp.dot(x, u_ref[...], preferred_element_type=jnp.float32)    # (TM, r) f32
    y = jnp.dot(low.astype(jnp.bfloat16), v_ref[...],
                preferred_element_type=jnp.float32)                     # (TM, d_out) f32
    y = y + b_ref[...].astype(jnp.float32)
    o_ref[...] = y.astype(o_ref.dtype)


def _choose_row_tile(m, d_in, d_out, budget_bytes=8 * 1024 * 1024, max_tm=1024):
    # Double-buffered bf16 input tile + (<=f32) output tile must stay well
    # inside the scoped-VMEM budget (v7x has only 64 MiB physical VMEM).
    bytes_per_row = 2 * (d_in * 2 + d_out * 4)
    tm = max(8, budget_bytes // max(bytes_per_row, 1))
    tm = min(tm, max_tm, m)
    if tm < m:
        tm = max(8, (tm // 8) * 8)        # keep sublane-aligned row tiles
    return tm


def low_rank_linear(x2d, u, v, b, *, out_dtype):
    m, d_in = x2d.shape
    rank = u.shape[1]
    d_out = v.shape[1]
    b2d = b.reshape(1, d_out)
    tm = _choose_row_tile(m, d_in, d_out)
    return pl.pallas_call(
        _low_rank_linear_kernel,
        out_shape=jax.ShapeDtypeStruct((m, d_out), out_dtype),
        grid=(pl.cdiv(m, tm),),
        in_specs=[
            pl.BlockSpec((tm, d_in), lambda i: (i, 0)),
            pl.BlockSpec((d_in, rank), lambda i: (0, 0)),
            pl.BlockSpec((rank, d_out), lambda i: (0, 0)),
            pl.BlockSpec((1, d_out), lambda i: (0, 0)),
        ],
        out_specs=pl.BlockSpec((tm, d_out), lambda i: (i, 0)),
        compiler_params=pltpu.CompilerParams(
            dimension_semantics=("parallel",),
            vmem_limit_bytes=32 * 1024 * 1024,
        ),
    )(x2d, u, v, b2d)


# ---------------------------------------------------------------------------
# Kernel 2: low-rank attention over the fused qkv slab, one batch row per step
#   q_low = q @ u_attn * scale ; k_low = k @ u_attn ; v_low = v @ u_attn
#   attn  = softmax(q_low @ k_low^T) ; ctx = (attn @ v_low) @ v_attn
# ---------------------------------------------------------------------------
def _low_rank_attn_kernel(qkv_ref, ua_ref, va_ref, o_ref, *,
                          n_heads, head_dim, d_model, scale):
    qkv = qkv_ref[0]                                    # (seq, 3*d_model) bf16
    ctx_heads = []
    for h in range(n_heads):                            # unrolled at trace time
        c0 = h * head_dim
        q = qkv[:, c0:c0 + head_dim]                                   # (seq, hd)
        k = qkv[:, d_model + c0:d_model + c0 + head_dim]
        v = qkv[:, 2 * d_model + c0:2 * d_model + c0 + head_dim]
        ua = ua_ref[h]                                                 # (hd, r)
        va = va_ref[h]                                                 # (r, hd)

        # bf16 MXU operands, f32 accumulation; softmax scale folded into q_low
        # ((seq, r) multiply instead of the (seq, seq) score matrix).
        q_low = (jnp.dot(q, ua, preferred_element_type=jnp.float32)
                 * scale).astype(jnp.bfloat16)
        k_low = jnp.dot(k, ua, preferred_element_type=jnp.float32).astype(jnp.bfloat16)
        v_low = jnp.dot(v, ua, preferred_element_type=jnp.float32).astype(jnp.bfloat16)

        # scores = q_low @ k_low^T (contract on rank)
        scores = lax.dot_general(q_low, k_low, (((1,), (1,)), ((), ())),
                                 preferred_element_type=jnp.float32)   # (seq, seq)
        mmax = jnp.max(scores, axis=-1, keepdims=True)
        e = jnp.exp(scores - mmax)
        inv_l = pl.reciprocal(jnp.sum(e, axis=-1, keepdims=True), approx=True)
        # TODO(synk): dropout on the attention weights is omitted (eval-mode
        # identity); only the mask=None path is implemented.

        # normalization folded in after the rank-sided matmul (EUP reciprocal
        # + (seq, r) multiply instead of a (seq, seq) divide).
        ctx_low = jnp.dot(e.astype(jnp.bfloat16), v_low,
                          preferred_element_type=jnp.float32)          # (seq, r)
        ctx_low = (ctx_low * inv_l).astype(jnp.bfloat16)
        ctx = jnp.dot(ctx_low, va, preferred_element_type=jnp.float32)  # (seq, hd)
        ctx_heads.append(ctx)

    # single lane-dense store of the whole (seq, d_model) slab for this batch.
    o_ref[0] = jnp.concatenate(ctx_heads, axis=-1).astype(o_ref.dtype)


def low_rank_attention_core(qkv, u_attn, v_attn, *, n_heads, head_dim, d_model, scale):
    bs, seq, three_d = qkv.shape
    rank = u_attn.shape[-1]
    kernel = functools.partial(_low_rank_attn_kernel, n_heads=n_heads,
                               head_dim=head_dim, d_model=d_model, scale=scale)
    # TODO(synk): for long sequences, tile over seq (online softmax) so the
    # (seq, seq) score/exp temporaries stay within VMEM.
    return pl.pallas_call(
        kernel,
        out_shape=jax.ShapeDtypeStruct((bs, seq, d_model), jnp.bfloat16),
        grid=(bs,),
        in_specs=[
            pl.BlockSpec((1, seq, three_d), lambda b: (b, 0, 0)),
            pl.BlockSpec((n_heads, head_dim, rank), lambda b: (0, 0, 0)),
            pl.BlockSpec((n_heads, rank, head_dim), lambda b: (0, 0, 0)),
        ],
        out_specs=pl.BlockSpec((1, seq, d_model), lambda b: (b, 0, 0)),
        compiler_params=pltpu.CompilerParams(
            dimension_semantics=("parallel",),
            vmem_limit_bytes=32 * 1024 * 1024,
        ),
    )(qkv, u_attn, v_attn)


# ---------------------------------------------------------------------------
# Full forward pass (only free reshapes in the wrapper — no transposes)
# ---------------------------------------------------------------------------
def low_rank_attention_forward(x, params, n_heads):
    bs, seq, d_model = x.shape
    head_dim = d_model // n_heads
    rank = params["rank"]
    scale = 1.0 / math.sqrt(rank)

    # bf16 activations between kernels (reference module computes in fp16,
    # so precision is comparable; output is cast back to fp16 at the end).
    x2d = x.astype(jnp.bfloat16).reshape(bs * seq, d_model)

    # qkv projection (row-tiled low-rank linear)
    qkv = low_rank_linear(x2d, params["qkv_u"], params["qkv_v"], params["qkv_b"],
                          out_dtype=jnp.bfloat16)
    qkv = qkv.reshape(bs, seq, 3 * d_model)            # free reshape, no transpose

    # per-batch, all-heads low-rank attention directly on the fused slab
    ctx = low_rank_attention_core(qkv, params["u_attn"], params["v_attn"],
                                  n_heads=n_heads, head_dim=head_dim,
                                  d_model=d_model, scale=scale)

    # output projection (row-tiled low-rank linear)
    out = low_rank_linear(ctx.reshape(bs * seq, d_model),
                          params["out_u"], params["out_v"], params["out_b"],
                          out_dtype=jnp.float32)
    return out.reshape(bs, seq, d_model).astype(jnp.float16)


# ---------------------------------------------------------------------------
# Deterministic parameter initialization (matches module __init__ shapes)
# ---------------------------------------------------------------------------
def init_params(key, d_model, n_heads, rank):
    head_dim = d_model // n_heads
    ks = jax.random.split(key, 6)

    def randn(k, shape, scale):
        # parameters live in bf16 (TPU-native stand-in for the module's fp16)
        return (jax.random.normal(k, shape, dtype=jnp.float32) * scale).astype(jnp.bfloat16)

    return {
        "qkv_u": randn(ks[0], (d_model, rank), 1.0 / d_model ** 0.5),
        "qkv_v": randn(ks[1], (rank, 3 * d_model), 1.0 / rank ** 0.5),
        "qkv_b": jnp.zeros((3 * d_model,), jnp.bfloat16),
        "out_u": randn(ks[2], (d_model, rank), 1.0 / d_model ** 0.5),
        "out_v": randn(ks[3], (rank, d_model), 1.0 / rank ** 0.5),
        "out_b": jnp.zeros((d_model,), jnp.bfloat16),
        "u_attn": randn(ks[4], (n_heads, head_dim, rank), 1.0 / head_dim ** 0.5),
        "v_attn": randn(ks[5], (n_heads, rank, head_dim), 1.0 / rank ** 0.5),
        "rank": rank,
    }


if __name__ == "__main__":
    d_model, n_heads, rank = 32, 4, 4
    bs, seq = 2, 8

    key = jax.random.PRNGKey(0)
    k_param, k_x = jax.random.split(key)
    params = init_params(k_param, d_model, n_heads, rank)

    x = jax.random.normal(k_x, (bs, seq, d_model), dtype=jnp.float32).astype(jnp.float16)

    out = low_rank_attention_forward(x, params, n_heads)
    out = jax.block_until_ready(out)

    assert out.shape == (bs, seq, d_model)
    assert out.dtype == jnp.float16
    print("KERNEL_OK")
</pallas_src>

<mosaic_0001>
module attributes {stable_mosaic.version = 11 : i64} {
  func.func @_low_rank_linear_kernel(%arg0: i32, %arg1: memref<16x32xbf16, #tpu.memory_space<vmem>>, %arg2: memref<32x4xbf16, #tpu.memory_space<vmem>>, %arg3: memref<4x96xbf16, #tpu.memory_space<vmem>>, %arg4: memref<1x96xbf16, #tpu.memory_space<vmem>>, %arg5: memref<16x96xbf16, #tpu.memory_space<vmem>>) attributes {dimension_semantics = [#tpu.dimension_semantics<parallel>], iteration_bounds = array<i64: 1>, scalar_prefetch = 0 : i64, scratch_operands = 0 : i64, tpu.core_type = #tpu.core_type<tc>, window_params = [{transform_indices = @transform_0, window_bounds = array<i64: 16, 32>}, {pipeline_mode = #tpu.pipeline_mode<synchronous>, transform_indices = @transform_1, window_bounds = array<i64: 32, 4>}, {pipeline_mode = #tpu.pipeline_mode<synchronous>, transform_indices = @transform_2, window_bounds = array<i64: 4, 96>}, {pipeline_mode = #tpu.pipeline_mode<synchronous>, transform_indices = @transform_3, window_bounds = array<i64: 1, 96>}, {transform_indices = @transform_4, window_bounds = array<i64: 16, 96>}]} {
    %c0 = arith.constant 0 : index
    %c0_0 = arith.constant 0 : index
    %0 = vector.load %arg1[%c0, %c0_0] : memref<16x32xbf16, #tpu.memory_space<vmem>>, vector<16x32xbf16>
    %c0_1 = arith.constant 0 : index
    %c0_2 = arith.constant 0 : index
    %1 = vector.load %arg2[%c0_1, %c0_2] : memref<32x4xbf16, #tpu.memory_space<vmem>>, vector<32x4xbf16>
    %cst = arith.constant dense<0.000000e+00> : vector<16x4xf32>
    %2 = tpu.matmul %0, %1, %cst {dimension_numbers = #tpu.dot_dimension_numbers<[1], [0], [0], [1], [0, 0, 1, 1], [], []>} : vector<16x32xbf16>, vector<32x4xbf16>, vector<16x4xf32> -> vector<16x4xf32>
    %3 = arith.truncf %2 : vector<16x4xf32> to vector<16x4xbf16>
    %c0_3 = arith.constant 0 : index
    %c0_4 = arith.constant 0 : index
    %4 = vector.load %arg3[%c0_3, %c0_4] : memref<4x96xbf16, #tpu.memory_space<vmem>>, vector<4x96xbf16>
    %cst_5 = arith.constant dense<0.000000e+00> : vector<16x96xf32>
    %5 = tpu.matmul %3, %4, %cst_5 {dimension_numbers = #tpu.dot_dimension_numbers<[1], [0], [0], [1], [0, 0, 1, 1], [], []>} : vector<16x4xbf16>, vector<4x96xbf16>, vector<16x96xf32> -> vector<16x96xf32>
    %c0_6 = arith.constant 0 : index
    %c0_7 = arith.constant 0 : index
    %6 = vector.load %arg4[%c0_6, %c0_7] : memref<1x96xbf16, #tpu.memory_space<vmem>>, vector<1x96xbf16>
    %7 = arith.extf %6 : vector<1x96xbf16> to vector<1x96xf32>
    %8 = vector.broadcast %7 : vector<1x96xf32> to vector<16x96xf32>
    %9 = arith.addf %5, %8 : vector<16x96xf32>
    %10 = arith.truncf %9 : vector<16x96xf32> to vector<16x96xbf16>
    %c0_8 = arith.constant 0 : index
    %c0_9 = arith.constant 0 : index
    %11 = vector.load %arg5[%c0_8, %c0_9] : memref<16x96xbf16, #tpu.memory_space<vmem>>, vector<16x96xbf16>
    tpu.vector_store %arg5[%c0_8, %c0_9], %10 {strides = array<i32>} : memref<16x96xbf16, #tpu.memory_space<vmem>>, vector<16x96xbf16>,
    return
  }
  func.func @transform_0(%arg0: i32) -> (i32, i32) {
    %c0_i32 = arith.constant 0 : i32
    %c0_i32_0 = arith.constant 0 : i32
    return %arg0, %c0_i32 : i32, i32
  }
  func.func @transform_1(%arg0: i32) -> (i32, i32) {
    %c0_i32 = arith.constant 0 : i32
    %c0_i32_0 = arith.constant 0 : i32
    %c0_i32_1 = arith.constant 0 : i32
    return %c0_i32, %c0_i32_0 : i32, i32
  }
  func.func @transform_2(%arg0: i32) -> (i32, i32) {
    %c0_i32 = arith.constant 0 : i32
    %c0_i32_0 = arith.constant 0 : i32
    %c0_i32_1 = arith.constant 0 : i32
    return %c0_i32, %c0_i32_0 : i32, i32
  }
  func.func @transform_3(%arg0: i32) -> (i32, i32) {
    %c0_i32 = arith.constant 0 : i32
    %c0_i32_0 = arith.constant 0 : i32
    %c0_i32_1 = arith.constant 0 : i32
    return %c0_i32, %c0_i32_0 : i32, i32
  }
  func.func @transform_4(%arg0: i32) -> (i32, i32) {
    %c0_i32 = arith.constant 0 : i32
    %c0_i32_0 = arith.constant 0 : i32
    return %arg0, %c0_i32 : i32, i32
  }
}

</mosaic_0001>

<llo_original>
// kernel: tpu_custom_call.1
$region0: #{tpu_custom_call.1}
  #allocation0 [shape = 'u32[]', space=smem, size = 0x4, offset = 0x4, fixed_abs, tag = 'smem constant byte address 0x4 - core index']
  #allocation1 [shape = 'u32[72,128]{1,0:T(1,128)}', space=vmem, size = 0x9000, scoped, tag = 'internal scratch']
  %s0 = inlined_call_operand.vmem [shape: bf16[16,32], index: 0, kind: input, shape index: {}]
  %s1 = inlined_call_operand.vmem [shape: bf16[32,4], index: 1, kind: input, shape index: {}]
  %s2 = inlined_call_operand.vmem [shape: bf16[4,96], index: 2, kind: input, shape index: {}]
  %s3 = inlined_call_operand.vmem [shape: bf16[1,96], index: 3, kind: input, shape index: {}]
  %s4 = inlined_call_operand.hbm [shape: bf16[16,96], index: 4, kind: output, shape index: {}]
  %s5 = sld [smem:[#allocation0]]
  $region26: #{tpu_custom_call.1} parent=0
    _
  %s7 = ssub.s32 1, %s5
  %s8 = scalar_select 0, %s7, %s5
  $region1: #{tpu_custom_call.1} parent=0
    #allocation2 [shape = 'u8[4096]{0}', space=vmem, size = 0x1000, scoped, tag = 'output window, operand 0, single buffered']
    #allocation3 [shape = 's32[1]{0}', space=sflag, size = 0x4, scoped, tag = 'scoped memory for tpu_custom_call.1']
    %9 = vsyncpa [#allocation3], 0
    // Predicated region
    $region2: #{tpu_custom_call.1} parent=1 // pred_check
      _
    $region3: #{tpu_custom_call.1} parent=1 // pred_check_branch
      %11 = sbr.rel (0) target = $region5
    $region4: #{tpu_custom_call.1} parent=1 // pred_region
      _
    $region5: #{tpu_custom_call.1} parent=1 // pred_fallthru
      _
    // Predicated region
    $region6: #{tpu_custom_call.1} parent=1 // pred_check
      _
    $region7: #{tpu_custom_call.1} parent=1 // pred_check_branch
      %13 = sbr.rel (0) target = $region9
    $region8: #{tpu_custom_call.1} parent=1 // pred_region
      _
    $region9: #{tpu_custom_call.1} parent=1 // pred_fallthru
      _
    // Predicated region
    $region10: #{tpu_custom_call.1} parent=1 // pred_check
      _
    $region11: #{tpu_custom_call.1} parent=1 // pred_check_branch
      %15 = sbr.rel (0) target = $region13
    $region12: #{tpu_custom_call.1} parent=1 // pred_region
      _
    $region13: #{tpu_custom_call.1} parent=1 // pred_fallthru
      _
    // Predicated region
    $region14: #{tpu_custom_call.1} parent=1 // pred_check
      _
    $region15: #{tpu_custom_call.1} parent=1 // pred_check_branch
      %17 = sbr.rel (0) target = $region17
    $region16: #{tpu_custom_call.1} parent=1 // pred_region
      _
    $region17: #{tpu_custom_call.1} parent=1 // pred_fallthru
      _
    %v19 = vld [vmem:[%s0] sm:$0xf]
    %v20 = vld [vmem:[%s0 + $0x4] sm:$0xf]
    %v21 = vld [vmem:[%s1] sm:$0xf]
    %v22 = vld [vmem:[%s1 + $0x4] sm:$0xf]
    %v23 = vld [vmem:[%s1 + $0x8] sm:$0xf]
    %v24 = vld [vmem:[%s1 + $0xc] sm:$0xf]
    %v27 = vunpack.c.l.b16 %v19
    %v28 = vunpack.c.l.b16 %v20
    %v29 = vpack.c.b16 %v28, %v27
    %v34 = vunpack.c.l.b16 %v21
    %v35 = vunpack.c.l.b16 %v22
    %v36 = vunpack.c.l.b16 %v23
    %v37 = vunpack.c.l.b16 %v24
    %v38 = vpack.c.b16 %v35, %v34
    %v39 = vpack.c.b16 %v37, %v36
    %vm42 = vcmask 261120
    %v44 = vsel %vm42, %v29, 0
    %46 = vmatpush.bf16.msra.mxu0 0
    %47 = vmatpush.bf16.msra.mxu0 0
    %48 = vmatpush.bf16.msra.mxu0 0
    %49 = vmatpush.bf16.msra.mxu0 0
    %50 = vmatpush.bf16.msra.mxu0 0
    %51 = vmatpush.bf16.msra.mxu0 0
    %52 = vmatpush.bf16.msra.mxu0 %v39
    %53 = vmatpush.bf16.msra.mxu0 %v38
    %54 = vmatmul.bf16.gmra.mxu0 %v44
    %v55 = vpop.f32.mrf.mxu0
    %v56 = vadd.f32 0.0, %v55
    %v57 = vpop.f32.mrf.mxu0
    %v58 = vadd.f32 0.0, %v57
    %59 = vdwg.mxu0
    %v60 = vpack.c.bf16 %v58, %v56
    %v61 = vld [vmem:[%s2] sm:$0x3]
    %v62 = vld [vmem:[%s3] sm:$0x1]
    %v63 = vunpack.c.l.bf16 %v62
    %v64 = vperm.slane %v63, 0
    %vm65 = vcmask 31744
    %v67 = vsel %vm65, %v60, 0
    %vm69 = vcmask 1041408
    %v71 = vsel %vm69, %v61, 0
    %73 = vmatpush.bf16.msra.mxu0 0
    %74 = vmatpush.bf16.msra.mxu0 0
    %75 = vmatpush.bf16.msra.mxu0 0
    %76 = vmatpush.bf16.msra.mxu0 0
    %77 = vmatpush.bf16.msra.mxu0 0
    %78 = vmatpush.bf16.msra.mxu0 0
    %79 = vmatpush.bf16.msra.mxu0 0
    %80 = vmatpush.bf16.msra.mxu0 %v71
    %81 = vmatmul.bf16.gmra.mxu0 %v67
    %v82 = vpop.f32.mrf.mxu0
    %v83 = vadd.f32 %v64, %v82
    %v84 = vpop.f32.mrf.mxu0
    %v85 = vadd.f32 %v64, %v84
    %86 = vdwg.mxu0
    %v87 = vpack.c.bf16 %v83, %v83
    %v88 = vpack.c.bf16 %v85, %v85
    %vm89 = vcmask 781312
    %90 = vst.msk [vmem:[#allocation2] sm:$0xf] %vm89, %v87
    %91 = vst.msk [vmem:[#allocation2 + $0x4] sm:$0xf] %vm89, %v88
    // Predicated region
    $region18: #{tpu_custom_call.1} parent=1 // pred_check
      _
    $region19: #{tpu_custom_call.1} parent=1 // pred_check_branch
      %93 = sbr.rel (0) target = $region21
    $region20: #{tpu_custom_call.1} parent=1 // pred_region
      %95 = vsyncadd [#allocation3], 0
      %s96 = sshll.u32 [#allocation2], 4
      %s97 = int_to_ptr.vmem [resolvable:$true] %s96
      %s98 = sshll.u32 %s4, 4
      %s99 = int_to_ptr.hbm [resolvable:$true] %s98
      %104 = dma.vmem_to_hbm [thread:$0]  %s97, 128, %s99, [#allocation3], 64, 64, 4
    $region21: #{tpu_custom_call.1} parent=1 // pred_fallthru
      _
    // Predicated region
    $region22: #{tpu_custom_call.1} parent=1 // pred_check
      _
    $region23: #{tpu_custom_call.1} parent=1 // pred_check_branch
      %106 = sbr.rel (0) target = $region25
    $region24: #{tpu_custom_call.1} parent=1 // pred_region
      %108 = dma.done [#allocation3], 128
    $region25: #{tpu_custom_call.1} parent=1 // pred_fallthru
      _
    %109 = vsyncpa [#allocation3], 1

</llo_original>
